<compile_context>
chip_gen: v6e
topology: v6e:2x2x1
jax: 0.10.0
libtpu: 0.0.40
codegen_flags: <defaults>
</compile_context>

<pallas_src>
import jax
import jax.numpy as jnp
from jax.experimental import pallas as pl
from jax.experimental.pallas import tpu as pltpu


def _copy_kernel(x_ref, o_ref):
    # Pure vreg copy: vld + vst only — no XLU / format ops (v5e has a single
    # vector-store slot, so anything extra per element lengthens the stream).
    o_ref[...] = x_ref[...]


def _choose_lane_width(total):
    """Largest lane-dense width (multiple of 128) that evenly divides total."""
    for lane in (8192, 4096, 2048, 1024, 512, 256, 128):
        if total % lane == 0:
            return lane
    return None


def _target_block_bytes():
    """Per-block byte target: ~2 MiB everywhere (safe under v5e's 16 MiB
    scoped default and v7x's 64 MiB physical VMEM), ~4 MiB on 128-MiB-VMEM
    chips (v5e/v6e) where we also raise vmem_limit_bytes below."""
    target = 2 * 1024 * 1024
    try:
        vmem = pltpu.get_tpu_info().vmem_capacity_bytes
    except Exception:
        vmem = 0
    if vmem >= 128 * 1024 * 1024:
        target = 4 * 1024 * 1024
    return target


def _pick_block_rows(rows, row_bytes, row_align):
    """Row-tile size: ~target bytes per block, dtype-aligned sublane groups,
    and >=2 grid steps whenever the row count allows it (keeps v7x's second
    TensorCore busy on the "parallel" axis)."""
    block_rows = max(1, _target_block_bytes() // max(1, row_bytes))
    block_rows = max(row_align, (block_rows // row_align) * row_align)
    if block_rows >= rows:
        block_rows = rows            # single full-extent block (always legal)
    if rows > row_align and pl.cdiv(rows, block_rows) < 2:
        # Split so the parallel grid axis has at least 2 steps.
        block_rows = row_align * pl.cdiv(pl.cdiv(rows, 2), row_align)
    return block_rows


def _tiled_copy_2d(x2d, block_rows, bytes_accessed):
    """Row-tiled, software-pipelined HBM->VMEM->HBM copy of a 2-D slab."""
    rows, cols = x2d.shape
    grid = (pl.cdiv(rows, block_rows),)
    return pl.pallas_call(
        _copy_kernel,
        out_shape=jax.ShapeDtypeStruct((rows, cols), x2d.dtype),
        grid_spec=pltpu.PrefetchScalarGridSpec(
            num_scalar_prefetch=0,
            grid=grid,
            in_specs=[pl.BlockSpec((block_rows, cols), lambda i: (i, 0))],
            out_specs=pl.BlockSpec((block_rows, cols), lambda i: (i, 0)),
        ),
        # "parallel": shards the row range across both TensorCores on v7x;
        # a no-op on v5e/v6e (single TC), so safe to set unconditionally.
        compiler_params=pltpu.CompilerParams(
            dimension_semantics=("parallel",),
            vmem_limit_bytes=32 * 1024 * 1024,
        ),
        cost_estimate=pl.CostEstimate(
            flops=0, transcendentals=0, bytes_accessed=bytes_accessed),
    )(x2d)


def _pallas_identity_copy(x):
    """Lane-dense, tiled, pipelined identity copy of x."""
    if x.ndim == 0 or x.size == 0:
        return x

    total = x.size
    itemsize = jnp.dtype(x.dtype).itemsize
    bytes_accessed = 2 * total * itemsize        # one read + one write
    # Sub-32-bit dtypes pack rows along sublanes: align to the packed group.
    row_align = 8 * max(1, 4 // itemsize)

    lane = _choose_lane_width(total)
    if lane is not None:
        # Lane-dense path: unmasked `vst` stores on a (rows, lane) slab.
        rows = total // lane
        block_rows = _pick_block_rows(rows, lane * itemsize, row_align)
        out2d = _tiled_copy_2d(x.reshape(rows, lane), block_rows,
                               bytes_accessed)
        return out2d.reshape(x.shape)

    # Ragged tail (total % 128 != 0): keep the trailing dim as-is (stores on
    # this path are inherently lane-masked) but still tile over rows so no
    # full-array VMEM residency is required and the copy stays pipelined.
    # TODO(synk): a single very wide ragged last dim could still exceed one
    # block's VMEM budget; a lane-dense bulk slab + masked-tail store would
    # cover that case.
    last = x.shape[-1]
    rows = total // last
    block_rows = _pick_block_rows(rows, last * itemsize, row_align)
    out2d = _tiled_copy_2d(x.reshape(rows, last), block_rows, bytes_accessed)
    return out2d.reshape(x.shape)


_pallas_identity_copy_jit = jax.jit(_pallas_identity_copy)


def simple_decoder_forward(features):
    """Production path: SimpleDecoder.forward is a pure identity.

    The highest-value "optimization" is to not round-trip through a kernel at
    all — just return features[0]."""
    return features[0]


def simple_decoder_forward_pallas(features):
    """Benchmark/validation path: same semantics, round-tripped through an
    optimized Pallas identity-copy kernel."""
    return _pallas_identity_copy_jit(features[0])


if __name__ == "__main__":
    key = jax.random.PRNGKey(0)
    k0, k1, k2, k3 = jax.random.split(key, 4)

    # Small NCHW feature maps consistent with a multi-level feature list.
    feat0 = jax.random.normal(k0, (2, 4, 16, 16), dtype=jnp.float32)
    feat1 = jax.random.normal(k1, (2, 4, 8, 8), dtype=jnp.float32)
    features = [feat0, feat1]

    # Production (zero-cost) path.
    out_prod = jax.block_until_ready(simple_decoder_forward(features))

    # Pallas copy path (exercises the lane-dense kernel).
    out_pallas = jax.block_until_ready(simple_decoder_forward_pallas(features))

    assert out_prod.shape == feat0.shape and out_prod.dtype == feat0.dtype
    assert out_pallas.shape == feat0.shape and out_pallas.dtype == feat0.dtype
    assert bool(jnp.array_equal(out_prod, feat0))
    assert bool(jnp.array_equal(out_pallas, feat0))

    # Extra validation: ragged (total % 128 != 0) fallback path, now row-tiled.
    ragged = jax.random.normal(k2, (3, 5, 7), dtype=jnp.float32)
    out_ragged = jax.block_until_ready(
        simple_decoder_forward_pallas([ragged, feat1]))
    assert bool(jnp.array_equal(out_ragged, ragged))

    # Extra validation: multi-block lane-dense path (>= 2 grid steps).
    big = jax.random.normal(k3, (2, 64, 64, 64), dtype=jnp.float32)
    out_big = jax.block_until_ready(simple_decoder_forward_pallas([big]))
    assert bool(jnp.array_equal(out_big, big))

    print("KERNEL_OK")
</pallas_src>

<mosaic_0001>
module attributes {stable_mosaic.version = 11 : i64} {
  func.func @_copy_kernel(%arg0: i32, %arg1: memref<1x2048xf32, #tpu.memory_space<vmem>>, %arg2: memref<1x2048xf32, #tpu.memory_space<vmem>>) attributes {dimension_semantics = [#tpu.dimension_semantics<parallel>], iteration_bounds = array<i64: 1>, scalar_prefetch = 0 : i64, scratch_operands = 0 : i64, tpu.core_type = #tpu.core_type<tc>, window_params = [{transform_indices = @transform_0, window_bounds = array<i64: 1, 2048>}, {transform_indices = @transform_1, window_bounds = array<i64: 1, 2048>}]} {
    %c0 = arith.constant 0 : index
    %c0_0 = arith.constant 0 : index
    %0 = vector.load %arg1[%c0, %c0_0] : memref<1x2048xf32, #tpu.memory_space<vmem>>, vector<1x2048xf32>
    %c0_1 = arith.constant 0 : index
    %c0_2 = arith.constant 0 : index
    %1 = vector.load %arg2[%c0_1, %c0_2] : memref<1x2048xf32, #tpu.memory_space<vmem>>, vector<1x2048xf32>
    tpu.vector_store %arg2[%c0_1, %c0_2], %0 {strides = array<i32>} : memref<1x2048xf32, #tpu.memory_space<vmem>>, vector<1x2048xf32>,
    return
  }
  func.func @transform_0(%arg0: i32) -> (i32, i32) {
    %c0_i32 = arith.constant 0 : i32
    %c0_i32_0 = arith.constant 0 : i32
    return %arg0, %c0_i32 : i32, i32
  }
  func.func @transform_1(%arg0: i32) -> (i32, i32) {
    %c0_i32 = arith.constant 0 : i32
    %c0_i32_0 = arith.constant 0 : i32
    return %arg0, %c0_i32 : i32, i32
  }
}

</mosaic_0001>

<llo_original>
// kernel: _pallas_identity_copy.1
$region0: #{_pallas_identity_copy.1}
  #allocation0 [shape = 'u32[]', space=smem, size = 0x4, offset = 0x4, fixed_abs, tag = 'smem constant byte address 0x4 - core index']
  #allocation1 [shape = 'u32[144,128]{1,0:T(1,128)}', space=vmem, size = 0x12000, scoped, tag = 'internal scratch']
  %s0 = inlined_call_operand.vmem [shape: f32[1,2048], index: 0, kind: input, shape index: {}]
  %s1 = inlined_call_operand.vmem [shape: f32[1,2048], index: 1, kind: output, shape index: {}]
  %s2 = sld [smem:[#allocation0]]
  $region14: #{_pallas_identity_copy.1} parent=0
    _
  %s4 = ssub.s32 1, %s2
  %s5 = scalar_select 0, %s4, %s2
  // Predicated region
  $region2: #{_pallas_identity_copy.1} parent=0 // pred_check
    _
  $region3: #{_pallas_identity_copy.1} parent=0 // pred_check_branch
    %7 = sbr.rel (0) target = $region5
  $region4: #{_pallas_identity_copy.1} parent=0 // pred_region
    _
  $region5: #{_pallas_identity_copy.1} parent=0 // pred_fallthru
    _
  %v8 = vld [vmem:[%s0] sm:$0xff]
  %v9 = vld [vmem:[%s0 + $0x8] sm:$0xff]
  %10 = vst [vmem:[%s1] sm:$0xff] %v8
  %11 = vst [vmem:[%s1 + $0x8] sm:$0xff] %v9
  // Predicated region
  $region6: #{_pallas_identity_copy.1} parent=0 // pred_check
    _
  $region7: #{_pallas_identity_copy.1} parent=0 // pred_check_branch
    %13 = sbr.rel (0) target = $region9
  $region8: #{_pallas_identity_copy.1} parent=0 // pred_region
    _
  $region9: #{_pallas_identity_copy.1} parent=0 // pred_fallthru
    _
  // Predicated region
  $region10: #{_pallas_identity_copy.1} parent=0 // pred_check
    _
  $region11: #{_pallas_identity_copy.1} parent=0 // pred_check_branch
    %15 = sbr.rel (0) target = $region13
  $region12: #{_pallas_identity_copy.1} parent=0 // pred_region
    _
  $region13: #{_pallas_identity_copy.1} parent=0 // pred_fallthru
    _

</llo_original>
